<compile_context>
chip_gen: v6e
topology: v6e:2x2x1
jax: 0.10.0
libtpu: 0.0.40
codegen_flags: <defaults>
</compile_context>

<pallas_src>
import jax
import jax.numpy as jnp
from jax.experimental import pallas as pl
from jax.experimental.pallas import tpu as pltpu


def _round_up(x, m):
    return ((x + m - 1) // m) * m


def _scatter_kernel(seq_ref, p_ref, out_ref):
    # grid = (batch_tiles, item_tiles); both axes are independent ("parallel").
    nj = pl.program_id(1)
    Bt, S = seq_ref.shape
    Nt = out_ref.shape[-1]
    n0 = nj * Nt                                                     # global item offset

    seq = seq_ref[...]                                               # [Bt, S] int32

    # Each batch row touches at most S item tiles out of N/Nt; skip the VPU
    # compare/select work entirely for tiles with no hits.
    hit = jnp.any((seq >= n0) & (seq < n0 + Nt))

    @pl.when(hit)
    def _scatter():
        ids = jax.lax.broadcasted_iota(jnp.int32, (Bt, Nt), 1) + n0  # [Bt, Nt]
        p = p_ref[...]                                               # [Bt, S] f32
        acc = jnp.zeros((Bt, Nt), jnp.float32)
        for s in range(S):                                           # S is small & static
            acc = acc + jnp.where(ids == seq[:, s:s + 1], p[:, s:s + 1], 0.0)
        out_ref[...] = acc.astype(out_ref.dtype)

    @pl.when(jnp.logical_not(hit))
    def _zero():
        out_ref[...] = jnp.zeros_like(out_ref)


def repeat_recommendation_decoder(all_memory, last_memory, seq_item, mask,
                                  Wr_w, Ur_w, Vr_w, Vr_b, num_item,
                                  *, block_b=128, block_n=8192,
                                  out_dtype=jnp.float32):
    """all_memory [B,S,H], last_memory [B,H], seq_item [B,S] int, mask [B,S] bool.

    Returns [B, num_item] repeat-probabilities (eval-mode dropout).
    """
    B, S, H = all_memory.shape
    N = int(num_item)
    f32 = jnp.float32

    # ------------- hoisted projections + softmax (plain XLA, f32) -------------
    Ur = jnp.asarray(Ur_w, f32)
    Wr = jnp.asarray(Wr_w, f32)
    Vr = jnp.asarray(Vr_w, f32).reshape(H)
    Vb = jnp.asarray(Vr_b, f32).reshape(())

    am = jnp.einsum('bsh,oh->bso', all_memory.astype(f32), Ur)       # Ur(all_memory)
    lm = jnp.einsum('bh,oh->bo', last_memory.astype(f32), Wr)        # Wr(last_memory)
    h = jnp.tanh(am + lm[:, None, :])                                # [B, S, H]
    scores = jnp.einsum('bsh,h->bs', h, Vr) + Vb                     # Vr projection
    scores = jnp.where(mask, jnp.float32(-1.0e9), scores)            # masked_fill_
    probs = jax.nn.softmax(scores.astype(f32), axis=-1)              # [B, S] f32

    # ------------------------------ tile selection ----------------------------
    Bt = min(_round_up(max(8, int(block_b)), 8), _round_up(B, 8))
    Nt = min(_round_up(max(128, int(block_n)), 128), _round_up(N, 128))
    # Cap the double-buffered output tile (~2 * Bt * Nt * itemsize) at ~16 MiB so
    # the kernel stays under the 32 MiB scoped-VMEM default on v7x.
    itemsize = jnp.dtype(out_dtype).itemsize
    while 2 * Bt * Nt * itemsize > 16 * 1024 * 1024 and Nt > 128:
        Nt //= 2
    Nt = max(128, _round_up(Nt, 128))

    Bp = _round_up(B, Bt)
    Np = _round_up(N, Nt)

    seq2 = seq_item.astype(jnp.int32)
    probs2 = probs
    if Bp != B:
        pb = Bp - B
        # Pad seq ids with Np (past the padded item range) so padded rows never
        # trigger a scatter; padded probs are zero and rows are sliced off anyway.
        seq2 = jnp.pad(seq2, ((0, pb), (0, 0)), constant_values=Np)
        probs2 = jnp.pad(probs2, ((0, pb), (0, 0)))

    grid_spec = pltpu.PrefetchScalarGridSpec(
        num_scalar_prefetch=0,
        grid=(Bp // Bt, Np // Nt),
        in_specs=[
            pl.BlockSpec((Bt, S), lambda bi, nj: (bi, 0)),           # seq item ids
            pl.BlockSpec((Bt, S), lambda bi, nj: (bi, 0)),           # softmax probs
        ],
        out_specs=pl.BlockSpec((Bt, Nt), lambda bi, nj: (bi, nj)),
    )

    cost = pl.CostEstimate(
        flops=2 * Bp * S * Np,                                       # scatter upper bound
        transcendentals=0,
        bytes_accessed=Bp * Np * itemsize + Bp * S * 8)

    out_padded = pl.pallas_call(
        _scatter_kernel,
        out_shape=jax.ShapeDtypeStruct((Bp, Np), out_dtype),
        grid_spec=grid_spec,
        compiler_params=pltpu.CompilerParams(
            dimension_semantics=("parallel", "parallel"),
            vmem_limit_bytes=32 * 1024 * 1024),
        cost_estimate=cost,
    )(seq2, probs2)

    return out_padded[:B, :N]


def _reference(all_memory, last_memory, seq_item, mask, Wr_w, Ur_w, Vr_w, Vr_b, num_item):
    # Pure-JAX f32 reference of the PyTorch forward (eval-mode dropout).
    am = jnp.einsum('bsh,oh->bso', all_memory, Ur_w)
    lm = jnp.einsum('bh,oh->bo', last_memory, Wr_w)[:, None, :]
    out = jnp.tanh(am + lm)
    scores = jnp.einsum('bsh,oh->bso', out, Vr_w)[..., 0] + Vr_b[0]
    scores = jnp.where(mask, -1.0e9, scores)
    probs = jax.nn.softmax(scores, axis=-1)                          # [B, S]
    onehot = jax.nn.one_hot(seq_item, num_item, dtype=jnp.float32)   # [B, S, N]
    return jnp.einsum('bs,bsn->bn', probs, onehot)


if __name__ == "__main__":
    B, S, H, N = 2, 8, 32, 64

    key = jax.random.PRNGKey(0)
    k1, k2, k3, k4, k5, k6, k7 = jax.random.split(key, 7)

    all_memory = jax.random.normal(k1, (B, S, H), dtype=jnp.float32)
    last_memory = jax.random.normal(k2, (B, H), dtype=jnp.float32)
    seq_item = jax.random.randint(k3, (B, S), 0, N, dtype=jnp.int32)
    mask = jax.random.bernoulli(k4, 0.25, (B, S))

    # Deterministic synthetic parameters (xavier-ish scaled normals; bias zero).
    xavier = (2.0 / (H + H)) ** 0.5
    Wr_w = xavier * jax.random.normal(k5, (H, H), dtype=jnp.float32)  # nn.Linear(H, H).weight
    Ur_w = xavier * jax.random.normal(k6, (H, H), dtype=jnp.float32)  # nn.Linear(H, H).weight
    Vr_w = (2.0 / (H + 1)) ** 0.5 * jax.random.normal(k7, (1, H), dtype=jnp.float32)
    Vr_b = jnp.zeros((1,), dtype=jnp.float32)

    out = repeat_recommendation_decoder(all_memory, last_memory, seq_item, mask,
                                        Wr_w, Ur_w, Vr_w, Vr_b, N)
    out = jax.block_until_ready(out)

    ref = _reference(all_memory, last_memory, seq_item, mask, Wr_w, Ur_w, Vr_w, Vr_b, N)
    assert out.shape == (B, N)
    # Everything up to the scatter is f32 XLA (same math as the reference), so a
    # tight tolerance holds.
    assert jnp.allclose(out, ref, atol=1e-5, rtol=1e-5), "mismatch vs reference"

    print("KERNEL_OK")
</pallas_src>

<mosaic_0001>
module attributes {stable_mosaic.version = 11 : i64} {
  func.func @_scatter_kernel(%arg0: i32, %arg1: i32, %arg2: memref<8x8xi32, #tpu.memory_space<vmem>>, %arg3: memref<8x8xf32, #tpu.memory_space<vmem>>, %arg4: memref<8x128xf32, #tpu.memory_space<vmem>>) attributes {dimension_semantics = [#tpu.dimension_semantics<parallel>, #tpu.dimension_semantics<parallel>], iteration_bounds = array<i64: 1, 1>, scalar_prefetch = 0 : i64, scratch_operands = 0 : i64, tpu.core_type = #tpu.core_type<tc>, window_params = [{transform_indices = @transform_0, window_bounds = array<i64: 8, 8>}, {transform_indices = @transform_1, window_bounds = array<i64: 8, 8>}, {transform_indices = @transform_2, window_bounds = array<i64: 8, 128>}]} {
    %c128_i32 = arith.constant 128 : i32
    %0 = arith.muli %arg1, %c128_i32 : i32
    %c0 = arith.constant 0 : index
    %c0_0 = arith.constant 0 : index
    %1 = vector.load %arg2[%c0, %c0_0] : memref<8x8xi32, #tpu.memory_space<vmem>>, vector<8x8xi32>
    %2 = vector.broadcast %0 : i32 to vector<8x8xi32>
    %3 = arith.cmpi sge, %1, %2 : vector<8x8xi32>
    %c128_i32_1 = arith.constant 128 : i32
    %4 = arith.addi %0, %c128_i32_1 : i32
    %5 = vector.broadcast %4 : i32 to vector<8x8xi32>
    %6 = arith.cmpi slt, %1, %5 : vector<8x8xi32>
    %7 = arith.andi %3, %6 : vector<8x8xi1>
    %cst = arith.constant 1.000000e+00 : f32
    %cst_2 = arith.constant 0.000000e+00 : f32
    %8 = vector.broadcast %cst : f32 to vector<8x8xf32>
    %9 = vector.broadcast %cst_2 : f32 to vector<8x8xf32>
    %10 = arith.select %7, %8, %9 : vector<8x8xi1>, vector<8x8xf32>
    %11 = vector.shape_cast %10 : vector<8x8xf32> to vector<1x8x8xf32>
    %cst_3 = arith.constant dense<0xFF800000> : vector<1xf32>
    %12 = vector.multi_reduction <maximumf>, %11, %cst_3 [1, 2] : vector<1x8x8xf32> to vector<1xf32>
    %13 = vector.shape_cast %12 : vector<1xf32> to vector<1x1x1xf32>
    %14 = vector.extract %13[0, 0, 0] : f32 from vector<1x1x1xf32>
    %cst_4 = arith.constant 0.000000e+00 : f32
    %15 = arith.cmpf ogt, %14, %cst_4 : f32
    %16 = arith.extui %15 : i1 to i32
    %c0_i32 = arith.constant 0 : i32
    %17 = arith.cmpi ne, %16, %c0_i32 : i32
    scf.if %17 {
      %21 = tpu.iota {dimensions = array<i32: 1>} : vector<8x128xi32>
      %22 = vector.broadcast %0 : i32 to vector<8x128xi32>
      %23 = arith.addi %21, %22 : vector<8x128xi32>
      %c0_6 = arith.constant 0 : index
      %c0_7 = arith.constant 0 : index
      %24 = vector.load %arg3[%c0_6, %c0_7] : memref<8x8xf32, #tpu.memory_space<vmem>>, vector<8x8xf32>
      %cst_8 = arith.constant 0.000000e+00 : f32
      %25 = vector.broadcast %cst_8 : f32 to vector<8x128xf32>
      %26 = vector.extract_strided_slice %1 {offsets = [0, 0], sizes = [8, 1], strides = [1, 1]} : vector<8x8xi32> to vector<8x1xi32>
      %27 = vector.broadcast %26 : vector<8x1xi32> to vector<8x128xi32>
      %28 = arith.cmpi eq, %23, %27 : vector<8x128xi32>
      %29 = vector.extract_strided_slice %24 {offsets = [0, 0], sizes = [8, 1], strides = [1, 1]} : vector<8x8xf32> to vector<8x1xf32>
      %cst_9 = arith.constant 0.000000e+00 : f32
      %30 = vector.shape_cast %29 : vector<8x1xf32> to vector<8x1xf32>
      %31 = vector.broadcast %30 : vector<8x1xf32> to vector<8x128xf32>
      %32 = vector.broadcast %cst_9 : f32 to vector<8x128xf32>
      %33 = arith.select %28, %31, %32 : vector<8x128xi1>, vector<8x128xf32>
      %34 = arith.addf %25, %33 : vector<8x128xf32>
      %35 = vector.extract_strided_slice %1 {offsets = [0, 1], sizes = [8, 1], strides = [1, 1]} : vector<8x8xi32> to vector<8x1xi32>
      %36 = vector.broadcast %35 : vector<8x1xi32> to vector<8x128xi32>
      %37 = arith.cmpi eq, %23, %36 : vector<8x128xi32>
      %38 = vector.extract_strided_slice %24 {offsets = [0, 1], sizes = [8, 1], strides = [1, 1]} : vector<8x8xf32> to vector<8x1xf32>
      %cst_10 = arith.constant 0.000000e+00 : f32
      %39 = vector.shape_cast %38 : vector<8x1xf32> to vector<8x1xf32>
      %40 = vector.broadcast %39 : vector<8x1xf32> to vector<8x128xf32>
      %41 = vector.broadcast %cst_10 : f32 to vector<8x128xf32>
      %42 = arith.select %37, %40, %41 : vector<8x128xi1>, vector<8x128xf32>
      %43 = arith.addf %34, %42 : vector<8x128xf32>
      %44 = vector.extract_strided_slice %1 {offsets = [0, 2], sizes = [8, 1], strides = [1, 1]} : vector<8x8xi32> to vector<8x1xi32>
      %45 = vector.broadcast %44 : vector<8x1xi32> to vector<8x128xi32>
      %46 = arith.cmpi eq, %23, %45 : vector<8x128xi32>
      %47 = vector.extract_strided_slice %24 {offsets = [0, 2], sizes = [8, 1], strides = [1, 1]} : vector<8x8xf32> to vector<8x1xf32>
      %cst_11 = arith.constant 0.000000e+00 : f32
      %48 = vector.shape_cast %47 : vector<8x1xf32> to vector<8x1xf32>
      %49 = vector.broadcast %48 : vector<8x1xf32> to vector<8x128xf32>
      %50 = vector.broadcast %cst_11 : f32 to vector<8x128xf32>
      %51 = arith.select %46, %49, %50 : vector<8x128xi1>, vector<8x128xf32>
      %52 = arith.addf %43, %51 : vector<8x128xf32>
      %53 = vector.extract_strided_slice %1 {offsets = [0, 3], sizes = [8, 1], strides = [1, 1]} : vector<8x8xi32> to vector<8x1xi32>
      %54 = vector.broadcast %53 : vector<8x1xi32> to vector<8x128xi32>
      %55 = arith.cmpi eq, %23, %54 : vector<8x128xi32>
      %56 = vector.extract_strided_slice %24 {offsets = [0, 3], sizes = [8, 1], strides = [1, 1]} : vector<8x8xf32> to vector<8x1xf32>
      %cst_12 = arith.constant 0.000000e+00 : f32
      %57 = vector.shape_cast %56 : vector<8x1xf32> to vector<8x1xf32>
      %58 = vector.broadcast %57 : vector<8x1xf32> to vector<8x128xf32>
      %59 = vector.broadcast %cst_12 : f32 to vector<8x128xf32>
      %60 = arith.select %55, %58, %59 : vector<8x128xi1>, vector<8x128xf32>
      %61 = arith.addf %52, %60 : vector<8x128xf32>
      %62 = vector.extract_strided_slice %1 {offsets = [0, 4], sizes = [8, 1], strides = [1, 1]} : vector<8x8xi32> to vector<8x1xi32>
      %63 = vector.broadcast %62 : vector<8x1xi32> to vector<8x128xi32>
      %64 = arith.cmpi eq, %23, %63 : vector<8x128xi32>
      %65 = vector.extract_strided_slice %24 {offsets = [0, 4], sizes = [8, 1], strides = [1, 1]} : vector<8x8xf32> to vector<8x1xf32>
      %cst_13 = arith.constant 0.000000e+00 : f32
      %66 = vector.shape_cast %65 : vector<8x1xf32> to vector<8x1xf32>
      %67 = vector.broadcast %66 : vector<8x1xf32> to vector<8x128xf32>
      %68 = vector.broadcast %cst_13 : f32 to vector<8x128xf32>
      %69 = arith.select %64, %67, %68 : vector<8x128xi1>, vector<8x128xf32>
      %70 = arith.addf %61, %69 : vector<8x128xf32>
      %71 = vector.extract_strided_slice %1 {offsets = [0, 5], sizes = [8, 1], strides = [1, 1]} : vector<8x8xi32> to vector<8x1xi32>
      %72 = vector.broadcast %71 : vector<8x1xi32> to vector<8x128xi32>
      %73 = arith.cmpi eq, %23, %72 : vector<8x128xi32>
      %74 = vector.extract_strided_slice %24 {offsets = [0, 5], sizes = [8, 1], strides = [1, 1]} : vector<8x8xf32> to vector<8x1xf32>
      %cst_14 = arith.constant 0.000000e+00 : f32
      %75 = vector.shape_cast %74 : vector<8x1xf32> to vector<8x1xf32>
      %76 = vector.broadcast %75 : vector<8x1xf32> to vector<8x128xf32>
      %77 = vector.broadcast %cst_14 : f32 to vector<8x128xf32>
      %78 = arith.select %73, %76, %77 : vector<8x128xi1>, vector<8x128xf32>
      %79 = arith.addf %70, %78 : vector<8x128xf32>
      %80 = vector.extract_strided_slice %1 {offsets = [0, 6], sizes = [8, 1], strides = [1, 1]} : vector<8x8xi32> to vector<8x1xi32>
      %81 = vector.broadcast %80 : vector<8x1xi32> to vector<8x128xi32>
      %82 = arith.cmpi eq, %23, %81 : vector<8x128xi32>
      %83 = vector.extract_strided_slice %24 {offsets = [0, 6], sizes = [8, 1], strides = [1, 1]} : vector<8x8xf32> to vector<8x1xf32>
      %cst_15 = arith.constant 0.000000e+00 : f32
      %84 = vector.shape_cast %83 : vector<8x1xf32> to vector<8x1xf32>
      %85 = vector.broadcast %84 : vector<8x1xf32> to vector<8x128xf32>
      %86 = vector.broadcast %cst_15 : f32 to vector<8x128xf32>
      %87 = arith.select %82, %85, %86 : vector<8x128xi1>, vector<8x128xf32>
      %88 = arith.addf %79, %87 : vector<8x128xf32>
      %89 = vector.extract_strided_slice %1 {offsets = [0, 7], sizes = [8, 1], strides = [1, 1]} : vector<8x8xi32> to vector<8x1xi32>
      %90 = vector.broadcast %89 : vector<8x1xi32> to vector<8x128xi32>
      %91 = arith.cmpi eq, %23, %90 : vector<8x128xi32>
      %92 = vector.extract_strided_slice %24 {offsets = [0, 7], sizes = [8, 1], strides = [1, 1]} : vector<8x8xf32> to vector<8x1xf32>
      %cst_16 = arith.constant 0.000000e+00 : f32
      %93 = vector.shape_cast %92 : vector<8x1xf32> to vector<8x1xf32>
      %94 = vector.broadcast %93 : vector<8x1xf32> to vector<8x128xf32>
      %95 = vector.broadcast %cst_16 : f32 to vector<8x128xf32>
      %96 = arith.select %91, %94, %95 : vector<8x128xi1>, vector<8x128xf32>
      %97 = arith.addf %88, %96 : vector<8x128xf32>
      %c0_17 = arith.constant 0 : index
      %c0_18 = arith.constant 0 : index
      %98 = vector.load %arg4[%c0_17, %c0_18] : memref<8x128xf32, #tpu.memory_space<vmem>>, vector<8x128xf32>
      tpu.vector_store %arg4[%c0_17, %c0_18], %97 {strides = array<i32>} : memref<8x128xf32, #tpu.memory_space<vmem>>, vector<8x128xf32>,
    } else {
    }
    %true = arith.constant true
    %18 = arith.xori %15, %true : i1
    %19 = arith.extui %18 : i1 to i32
    %c0_i32_5 = arith.constant 0 : i32
    %20 = arith.cmpi ne, %19, %c0_i32_5 : i32
    scf.if %20 {
      %cst_6 = arith.constant 0.000000e+00 : f32
      %21 = vector.broadcast %cst_6 : f32 to vector<8x128xf32>
      %c0_7 = arith.constant 0 : index
      %c0_8 = arith.constant 0 : index
      %22 = vector.load %arg4[%c0_7, %c0_8] : memref<8x128xf32, #tpu.memory_space<vmem>>, vector<8x128xf32>
      tpu.vector_store %arg4[%c0_7, %c0_8], %21 {strides = array<i32>} : memref<8x128xf32, #tpu.memory_space<vmem>>, vector<8x128xf32>,
    } else {
    }
    return
  }
  func.func @transform_0(%arg0: i32, %arg1: i32) -> (i32, i32) {
    %c0_i32 = arith.constant 0 : i32
    %c0_i32_0 = arith.constant 0 : i32
    return %arg0, %c0_i32 : i32, i32
  }
  func.func @transform_1(%arg0: i32, %arg1: i32) -> (i32, i32) {
    %c0_i32 = arith.constant 0 : i32
    %c0_i32_0 = arith.constant 0 : i32
    return %arg0, %c0_i32 : i32, i32
  }
  func.func @transform_2(%arg0: i32, %arg1: i32) -> (i32, i32) {
    %c0_i32 = arith.constant 0 : i32
    return %arg0, %arg1 : i32, i32
  }
}

</mosaic_0001>

<llo_original>
// kernel: tpu_custom_call.1
$region0: #{tpu_custom_call.1}
  #allocation0 [shape = 'u32[]', space=smem, size = 0x4, offset = 0x4, fixed_abs, tag = 'smem constant byte address 0x4 - core index']
  #allocation1 [shape = 'u32[144,128]{1,0:T(1,128)}', space=vmem, size = 0x12000, scoped, tag = 'internal scratch']
  %s0 = inlined_call_operand.hbm [shape: s32[8,8], index: 0, kind: input, shape index: {}]
  %s1 = inlined_call_operand.hbm [shape: f32[8,8], index: 1, kind: input, shape index: {}]
  %s2 = inlined_call_operand.hbm [shape: f32[8,128], index: 2, kind: output, shape index: {}]
  %s3 = sld [smem:[#allocation0]]
  $region34: #{tpu_custom_call.1} parent=0
    _
  %s5 = ssub.s32 1, %s3
  %s6 = scalar_select 0, %s5, %s3
  $region1: #{tpu_custom_call.1} parent=0
    #allocation2 [shape = 'u8[4096]{0}', space=vmem, size = 0x1000, scoped, tag = 'input window, operand 0, single buffered']
    #allocation3 [shape = 's32[1]{0}', space=sflag, size = 0x4, scoped, tag = 'scoped memory for tpu_custom_call.1']
    #allocation4 [shape = 's32[1]{0}', space=sflag, size = 0x4, scoped, tag = 'scoped memory for tpu_custom_call.1']
    #allocation5 [shape = 'u8[4096]{0}', space=vmem, size = 0x1000, scoped, tag = 'input window, operand 1, single buffered']
    #allocation6 [shape = 's32[1]{0}', space=sflag, size = 0x4, scoped, tag = 'scoped memory for tpu_custom_call.1']
    #allocation7 [shape = 'u8[4096]{0}', space=vmem, size = 0x1000, scoped, tag = 'output window, operand 0, single buffered']
    %7 = vsyncpa [#allocation3], 0
    %8 = vsyncpa [#allocation6], 0
    %9 = vsyncpa [#allocation4], 0
    // Predicated region
    $region2: #{tpu_custom_call.1} parent=1 // pred_check
      _
    $region3: #{tpu_custom_call.1} parent=1 // pred_check_branch
      %11 = sbr.rel (0) target = $region5
    $region4: #{tpu_custom_call.1} parent=1 // pred_region
      %s13 = ssub.s32 128, 128
      %14 = vsyncadd [#allocation3], %s13
      %s16 = sshll.u32 [#allocation2], 4
      %s17 = int_to_ptr.vmem [resolvable:$true] %s16
      %19 = dma.hbm_to_vmem [thread:$0]  %s0, 128, %s17, [#allocation3]
    $region5: #{tpu_custom_call.1} parent=1 // pred_fallthru
      _
    // Predicated region
    $region6: #{tpu_custom_call.1} parent=1 // pred_check
      _
    $region7: #{tpu_custom_call.1} parent=1 // pred_check_branch
      %21 = sbr.rel (0) target = $region9
    $region8: #{tpu_custom_call.1} parent=1 // pred_region
      %s23 = ssub.s32 128, 128
      %24 = vsyncadd [#allocation6], %s23
      %s26 = sshll.u32 [#allocation5], 4
      %s27 = int_to_ptr.vmem [resolvable:$true] %s26
      %29 = dma.hbm_to_vmem [thread:$0]  %s1, 128, %s27, [#allocation6]
    $region9: #{tpu_custom_call.1} parent=1 // pred_fallthru
      _
    // Predicated region
    $region10: #{tpu_custom_call.1} parent=1 // pred_check
      _
    $region11: #{tpu_custom_call.1} parent=1 // pred_check_branch
      %31 = sbr.rel (0) target = $region13
    $region12: #{tpu_custom_call.1} parent=1 // pred_region
      %32 = dma.done [#allocation3], 128
    $region13: #{tpu_custom_call.1} parent=1 // pred_fallthru
      _
    // Predicated region
    $region14: #{tpu_custom_call.1} parent=1 // pred_check
      _
    $region15: #{tpu_custom_call.1} parent=1 // pred_check_branch
      %34 = sbr.rel (0) target = $region17
    $region16: #{tpu_custom_call.1} parent=1 // pred_region
      %35 = dma.done [#allocation6], 128
    $region17: #{tpu_custom_call.1} parent=1 // pred_fallthru
      _
    %s36 = smul.u32 0, 128
    %v37 = vld [vmem:[#allocation2] sm:$0xff]
    %v38 = vstv %s36
    %vm39 = vcmp.ge.s32.totalorder %v37, %v38
    %s40 = sadd.s32 %s36, 128
    %v41 = vstv %s40
    %vm42 = vcmp.lt.s32.totalorder %v37, %v41
    %vm43 = vmand %vm39, %vm42
    %v44 = vsel %vm43, 1.0, 0.0
    %vm45 = vcmask 64512
    %v46 = vsel %vm45, %v44, -inf
    %47 = vmax.xlane.f32.xlu0 %v46
    %v48 = vpop.xlane.xlu0 %47
    %v49 = vrot.slane %v48, 4
    %v50 = vmax.f32 %v48, %v49
    %v51 = vrot.slane %v50, 2
    %v52 = vmax.f32 %v50, %v51
    %v53 = vrot.slane %v52, 1
    %v54 = vmax.f32 %v52, %v53
    %s55 = vtos %v54
    %p56 = scmp.gt.f32.partialorder %s55, 0.0
    // Predicated region
    $region18: #{tpu_custom_call.1} parent=1 // pred_check
      %p57 = pneg %p56
    $region19: #{tpu_custom_call.1} parent=1 // pred_check_branch
      %59 = sbr.rel (%p57) target = $region21
    $region20: #{tpu_custom_call.1} parent=1 // pred_region
      %v60 = vlaneseq
      %v61 = vand.u32 %v60, 127
      %v62 = vadd.s32 %v61, %v38
      %v63 = vld [vmem:[#allocation5] sm:$0xff]
      %64 = vset.pattern.permute.xlu0 0
      %65 = vperm.xlu0 %64, %v37
      %v66 = vpop.permute.xlu0 %65
      %vm67 = vcmp.eq.s32.totalorder %v62, %v66
      %69 = vset.pattern.permute.xlu0 0
      %70 = vperm.xlu0 %69, %v63
      %v71 = vpop.permute.xlu0 %70
      %v73 = vsel %vm67, %v71, 0.0
      %v74 = vadd.f32 %v73, 0.0
      %75 = vset.pattern.permute.xlu0 1
      %76 = vperm.xlu0 %75, %v37
      %v77 = vpop.permute.xlu0 %76
      %vm78 = vcmp.eq.s32.totalorder %v62, %v77
      %79 = vset.pattern.permute.xlu0 1
      %80 = vperm.xlu0 %79, %v63
      %v81 = vpop.permute.xlu0 %80
      %v83 = vsel %vm78, %v81, 0.0
      %v84 = vadd.f32 %v74, %v83
      %85 = vset.pattern.permute.xlu0 2
      %86 = vperm.xlu0 %85, %v37
      %v87 = vpop.permute.xlu0 %86
      %vm88 = vcmp.eq.s32.totalorder %v62, %v87
      %89 = vset.pattern.permute.xlu0 2
      %90 = vperm.xlu0 %89, %v63
      %v91 = vpop.permute.xlu0 %90
      %v93 = vsel %vm88, %v91, 0.0
      %v94 = vadd.f32 %v84, %v93
      %95 = vset.pattern.permute.xlu0 3
      %96 = vperm.xlu0 %95, %v37
      %v97 = vpop.permute.xlu0 %96
      %vm98 = vcmp.eq.s32.totalorder %v62, %v97
      %99 = vset.pattern.permute.xlu0 3
      %100 = vperm.xlu0 %99, %v63
      %v101 = vpop.permute.xlu0 %100
      %v103 = vsel %vm98, %v101, 0.0
      %v104 = vadd.f32 %v94, %v103
      %105 = vset.pattern.permute.xlu0 4
      %106 = vperm.xlu0 %105, %v37
      %v107 = vpop.permute.xlu0 %106
      %vm108 = vcmp.eq.s32.totalorder %v62, %v107
      %109 = vset.pattern.permute.xlu0 4
      %110 = vperm.xlu0 %109, %v63
      %v111 = vpop.permute.xlu0 %110
      %v113 = vsel %vm108, %v111, 0.0
      %v114 = vadd.f32 %v104, %v113
      %115 = vset.pattern.permute.xlu0 5
      %116 = vperm.xlu0 %115, %v37
      %v117 = vpop.permute.xlu0 %116
      %vm118 = vcmp.eq.s32.totalorder %v62, %v117
      %119 = vset.pattern.permute.xlu0 5
      %120 = vperm.xlu0 %119, %v63
      %v121 = vpop.permute.xlu0 %120
      %v123 = vsel %vm118, %v121, 0.0
      %v124 = vadd.f32 %v114, %v123
      %125 = vset.pattern.permute.xlu0 6
      %126 = vperm.xlu0 %125, %v37
      %v127 = vpop.permute.xlu0 %126
      %vm128 = vcmp.eq.s32.totalorder %v62, %v127
      %129 = vset.pattern.permute.xlu0 6
      %130 = vperm.xlu0 %129, %v63
      %v131 = vpop.permute.xlu0 %130
      %v133 = vsel %vm128, %v131, 0.0
      %v134 = vadd.f32 %v124, %v133
      %135 = vset.pattern.permute.xlu0 7
      %136 = vperm.xlu0 %135, %v37
      %v137 = vpop.permute.xlu0 %136
      %vm138 = vcmp.eq.s32.totalorder %v62, %v137
      %139 = vset.pattern.permute.xlu0 7
      %140 = vperm.xlu0 %139, %v63
      %v141 = vpop.permute.xlu0 %140
      %v143 = vsel %vm138, %v141, 0.0
      %v144 = vadd.f32 %v134, %v143
      %145 = vst [vmem:[#allocation7] sm:$0xff] %v144
    $region21: #{tpu_custom_call.1} parent=1 // pred_fallthru
      _
    %p146 = pneg %p56
    // Predicated region
    $region22: #{tpu_custom_call.1} parent=1 // pred_check
      _
    $region23: #{tpu_custom_call.1} parent=1 // pred_check_branch
      %148 = sbr.rel (%p56) target = $region25
    $region24: #{tpu_custom_call.1} parent=1 // pred_region
      %149 = vst [vmem:[#allocation7] sm:$0xff] 0.0
    $region25: #{tpu_custom_call.1} parent=1 // pred_fallthru
      _
    // Predicated region
    $region26: #{tpu_custom_call.1} parent=1 // pred_check
      _
    $region27: #{tpu_custom_call.1} parent=1 // pred_check_branch
      %151 = sbr.rel (0) target = $region29
    $region28: #{tpu_custom_call.1} parent=1 // pred_region
      %s153 = ssub.s32 128, 128
      %154 = vsyncadd [#allocation4], %s153
      %s156 = sshll.u32 [#allocation7], 4
      %s157 = int_to_ptr.vmem [resolvable:$true] %s156
      %159 = dma.vmem_to_hbm [thread:$0]  %s157, 128, %s2, [#allocation4]
    $region29: #{tpu_custom_call.1} parent=1 // pred_fallthru
      _
    // Predicated region
    $region30: #{tpu_custom_call.1} parent=1 // pred_check
      _
    $region31: #{tpu_custom_call.1} parent=1 // pred_check_branch
      %161 = sbr.rel (0) target = $region33
    $region32: #{tpu_custom_call.1} parent=1 // pred_region
      %162 = dma.done [#allocation4], 128
    $region33: #{tpu_custom_call.1} parent=1 // pred_fallthru
      _
    %163 = vsyncpa [#allocation3], 1
    %164 = vsyncpa [#allocation6], 1
    %165 = vsyncpa [#allocation4], 1

</llo_original>
